<compile_context>
chip_gen: v6e
topology: v6e:2x2x1
jax: 0.10.0
libtpu: 0.0.40
codegen_flags: <defaults>
</compile_context>

<pallas_src>
import jax
import jax.numpy as jnp
from jax.experimental import pallas as pl
from jax.experimental.pallas import tpu as pltpu


def rnn_kernel(x_ref, len_ref, wih_ref, whh_ref, b_ref, wfc_ref, bfc_ref, out_ref):
    # Shapes (all static at trace time):
    #   x_ref   : (S*B, E)   bf16   -- time-major flattened embeddings
    #   len_ref : (B, 1)     int32  -- per-sequence valid lengths
    #   wih_ref : (E, Hp)    bf16   -- W_ih^T, lane-padded
    #   whh_ref : (Hp, Hp)   bf16   -- W_hh^T, lane-padded
    #   b_ref   : (1, Hp)    f32    -- b_ih + b_hh, lane-padded
    #   wfc_ref : (Hp, Op)   bf16   -- fc.weight^T, lane-padded
    #   bfc_ref : (1, Op)    f32    -- fc.bias, lane-padded
    #   out_ref : (B, Op)    f32
    B = len_ref.shape[0]
    SB = x_ref.shape[0]
    S = SB // B
    Hp = whh_ref.shape[0]

    # Hoisted input projection: one large bf16 matmul with f32 accumulation.
    u = (jnp.dot(x_ref[...], wih_ref[...], preferred_element_type=jnp.float32)
         + b_ref[...])                                   # (S*B, Hp) f32

    # Broadcast lengths once (hoisted out of the loop).
    len_b = jnp.broadcast_to(len_ref[...], (B, Hp))      # (B, Hp) int32

    h = jnp.zeros((B, Hp), jnp.float32)
    h_last = h

    # Recurrence, fully unrolled; only the serial dependency h -> h stays per step.
    for t in range(S):
        u_t = u[t * B:(t + 1) * B]                       # static slice, (B, Hp)
        pre = u_t + jnp.dot(h.astype(jnp.bfloat16), whh_ref[...],
                            preferred_element_type=jnp.float32)
        h = jnp.tanh(pre)
        # pack_padded_sequence: capture h at each sequence's last valid step.
        h_last = jnp.where(len_b == (t + 1), h, h_last)

    # Dropout is identity (p=0).  Final FC on the captured hidden; lane-dense output.
    out = (jnp.dot(h_last.astype(jnp.bfloat16), wfc_ref[...],
                   preferred_element_type=jnp.float32) + bfc_ref[...])
    out_ref[...] = out.astype(out_ref.dtype)


def rnn_forward(text, text_lengths, emb, wih, whh, b, wfc, bfc):
    """text: (S, B) int32 token ids; returns (B, O) f32, matching GensimPackedRNN.forward."""
    S, B = text.shape
    E = emb.shape[1]
    H = whh.shape[0]
    O = wfc.shape[1]
    Hp = max(128, ((H + 127) // 128) * 128)   # lane-dense hidden width
    Op = max(128, ((O + 127) // 128) * 128)   # lane-dense output width

    # Embedding gather (plain-JAX glue), time-major flatten, bf16 for the MXU path.
    x = emb[text].reshape(S * B, E).astype(jnp.bfloat16)

    # Zero-pad hidden/output lane dims to 128; padded columns stay exactly zero
    # through tanh and contribute nothing, so results are unchanged.
    wih_p = jnp.zeros((E, Hp), jnp.bfloat16).at[:, :H].set(wih.astype(jnp.bfloat16))
    whh_p = jnp.zeros((Hp, Hp), jnp.bfloat16).at[:H, :H].set(whh.astype(jnp.bfloat16))
    b_p = jnp.zeros((1, Hp), jnp.float32).at[:, :H].set(b)
    wfc_p = jnp.zeros((Hp, Op), jnp.bfloat16).at[:H, :O].set(wfc.astype(jnp.bfloat16))
    bfc_p = jnp.zeros((1, Op), jnp.float32).at[:, :O].set(bfc)

    lengths = text_lengths.astype(jnp.int32).reshape(B, 1)

    # Single grid point: every operand is a whole-array VMEM block loaded once
    # (no auto-pipeline double-buffering of constant weights, no per-step grid overhead).
    out_p = pl.pallas_call(
        rnn_kernel,
        out_shape=jax.ShapeDtypeStruct((B, Op), jnp.float32),
        in_specs=[pl.BlockSpec(memory_space=pltpu.MemorySpace.VMEM)] * 7,
        out_specs=pl.BlockSpec(memory_space=pltpu.MemorySpace.VMEM),
        compiler_params=pltpu.CompilerParams(vmem_limit_bytes=32 * 1024 * 1024),
    )(x, lengths, wih_p, whh_p, b_p, wfc_p, bfc_p)

    return out_p[:, :O]


def rnn_reference(text, text_lengths, emb, wih, whh, b, wfc, bfc):
    """Pure-JAX reference mirroring GensimPackedRNN.forward (packed semantics),
    using the same bf16-weight / f32-accumulate numerics as the kernel."""
    x = emb[text].astype(jnp.bfloat16)                   # (S, B, E)
    S, B, _ = x.shape
    H = whh.shape[0]
    wih_b = wih.astype(jnp.bfloat16)
    whh_b = whh.astype(jnp.bfloat16)
    wfc_b = wfc.astype(jnp.bfloat16)
    h = jnp.zeros((B, H), jnp.float32)
    h_last = h
    for t in range(S):
        pre = (jnp.dot(x[t], wih_b, preferred_element_type=jnp.float32)
               + jnp.dot(h.astype(jnp.bfloat16), whh_b, preferred_element_type=jnp.float32)
               + b)
        h = jnp.tanh(pre)
        h_last = jnp.where((text_lengths == (t + 1))[:, None], h, h_last)
    return (jnp.dot(h_last.astype(jnp.bfloat16), wfc_b,
                    preferred_element_type=jnp.float32) + bfc)


if __name__ == "__main__":
    # Small shapes consistent with the module: nn.RNN(300, hidden_dim), tiny vocab/batch.
    VOCAB, EMB, HID, OUT = 50, 300, 32, 4
    SEQ, BATCH = 8, 2

    key = jax.random.PRNGKey(0)
    k_emb, k_wih, k_whh, k_bih, k_bhh, k_wfc, k_bfc, k_text = jax.random.split(key, 8)

    # Deterministic parameters (PyTorch-style uniform(-1/sqrt(H), 1/sqrt(H))),
    # random table standing in for the pretrained word2vec embedding matrix.
    kr = 1.0 / jnp.sqrt(jnp.float32(HID))
    emb = jax.random.normal(k_emb, (VOCAB, EMB), jnp.float32)
    wih = jax.random.uniform(k_wih, (EMB, HID), jnp.float32, -kr, kr)   # = W_ih^T
    whh = jax.random.uniform(k_whh, (HID, HID), jnp.float32, -kr, kr)   # = W_hh^T
    b = (jax.random.uniform(k_bih, (1, HID), jnp.float32, -kr, kr)
         + jax.random.uniform(k_bhh, (1, HID), jnp.float32, -kr, kr))   # b_ih + b_hh
    wfc = jax.random.uniform(k_wfc, (HID, OUT), jnp.float32, -kr, kr)   # = fc.weight^T
    bfc = jax.random.uniform(k_bfc, (1, OUT), jnp.float32, -kr, kr)

    text = jax.random.randint(k_text, (SEQ, BATCH), 0, VOCAB, jnp.int32)
    # Decreasing lengths (as pack_padded_sequence expects); second sequence is padded.
    text_lengths = jnp.array([SEQ, 5], jnp.int32)

    out = rnn_forward(text, text_lengths, emb, wih, whh, b, wfc, bfc)
    out = jax.block_until_ready(out)

    ref = rnn_reference(text, text_lengths, emb, wih, whh, b, wfc, bfc)
    assert out.shape == (BATCH, OUT)
    assert jnp.allclose(out, ref, atol=2e-3, rtol=2e-3), (out, ref)

    print("KERNEL_OK")
</pallas_src>

<mosaic_0001>
module attributes {stable_mosaic.version = 11 : i64} {
  func.func @rnn_kernel(%arg0: memref<16x300xbf16, #tpu.memory_space<vmem>>, %arg1: memref<2x1xi32, #tpu.memory_space<vmem>>, %arg2: memref<300x128xbf16, #tpu.memory_space<vmem>>, %arg3: memref<128x128xbf16, #tpu.memory_space<vmem>>, %arg4: memref<1x128xf32, #tpu.memory_space<vmem>>, %arg5: memref<128x128xbf16, #tpu.memory_space<vmem>>, %arg6: memref<1x128xf32, #tpu.memory_space<vmem>>, %arg7: memref<2x128xf32, #tpu.memory_space<vmem>>) attributes {dimension_semantics = [], scalar_prefetch = 0 : i64, scratch_operands = 0 : i64, tpu.core_type = #tpu.core_type<tc>} {
    %c0 = arith.constant 0 : index
    %c0_0 = arith.constant 0 : index
    %0 = vector.load %arg0[%c0, %c0_0] : memref<16x300xbf16, #tpu.memory_space<vmem>>, vector<16x300xbf16>
    %c0_1 = arith.constant 0 : index
    %c0_2 = arith.constant 0 : index
    %1 = vector.load %arg2[%c0_1, %c0_2] : memref<300x128xbf16, #tpu.memory_space<vmem>>, vector<300x128xbf16>
    %cst = arith.constant dense<0.000000e+00> : vector<16x128xf32>
    %2 = tpu.matmul %0, %1, %cst {dimension_numbers = #tpu.dot_dimension_numbers<[1], [0], [0], [1], [0, 0, 1, 1], [], []>} : vector<16x300xbf16>, vector<300x128xbf16>, vector<16x128xf32> -> vector<16x128xf32>
    %c0_3 = arith.constant 0 : index
    %c0_4 = arith.constant 0 : index
    %3 = vector.load %arg4[%c0_3, %c0_4] : memref<1x128xf32, #tpu.memory_space<vmem>>, vector<1x128xf32>
    %4 = vector.broadcast %3 : vector<1x128xf32> to vector<16x128xf32>
    %5 = arith.addf %2, %4 : vector<16x128xf32>
    %c0_5 = arith.constant 0 : index
    %c0_6 = arith.constant 0 : index
    %6 = vector.load %arg1[%c0_5, %c0_6] : memref<2x1xi32, #tpu.memory_space<vmem>>, vector<2x1xi32>
    %7 = vector.shape_cast %6 : vector<2x1xi32> to vector<2x1xi32>
    %8 = vector.broadcast %7 : vector<2x1xi32> to vector<2x128xi32>
    %cst_7 = arith.constant 0.000000e+00 : f32
    %9 = vector.broadcast %cst_7 : f32 to vector<2x128xf32>
    %10 = vector.extract_strided_slice %5 {offsets = [0, 0], sizes = [2, 128], strides = [1, 1]} : vector<16x128xf32> to vector<2x128xf32>
    %11 = arith.truncf %9 : vector<2x128xf32> to vector<2x128xbf16>
    %c0_8 = arith.constant 0 : index
    %c0_9 = arith.constant 0 : index
    %12 = vector.load %arg3[%c0_8, %c0_9] : memref<128x128xbf16, #tpu.memory_space<vmem>>, vector<128x128xbf16>
    %cst_10 = arith.constant dense<0.000000e+00> : vector<2x128xf32>
    %13 = tpu.matmul %11, %12, %cst_10 {dimension_numbers = #tpu.dot_dimension_numbers<[1], [0], [0], [1], [0, 0, 1, 1], [], []>} : vector<2x128xbf16>, vector<128x128xbf16>, vector<2x128xf32> -> vector<2x128xf32>
    %14 = arith.addf %10, %13 : vector<2x128xf32>
    %15 = math.tanh %14 : vector<2x128xf32>
    %c1_i32 = arith.constant 1 : i32
    %16 = vector.broadcast %c1_i32 : i32 to vector<2x128xi32>
    %17 = arith.cmpi eq, %8, %16 : vector<2x128xi32>
    %18 = arith.select %17, %15, %9 : vector<2x128xi1>, vector<2x128xf32>
    %19 = vector.extract_strided_slice %5 {offsets = [2, 0], sizes = [2, 128], strides = [1, 1]} : vector<16x128xf32> to vector<2x128xf32>
    %20 = arith.truncf %15 : vector<2x128xf32> to vector<2x128xbf16>
    %c0_11 = arith.constant 0 : index
    %c0_12 = arith.constant 0 : index
    %21 = vector.load %arg3[%c0_11, %c0_12] : memref<128x128xbf16, #tpu.memory_space<vmem>>, vector<128x128xbf16>
    %cst_13 = arith.constant dense<0.000000e+00> : vector<2x128xf32>
    %22 = tpu.matmul %20, %21, %cst_13 {dimension_numbers = #tpu.dot_dimension_numbers<[1], [0], [0], [1], [0, 0, 1, 1], [], []>} : vector<2x128xbf16>, vector<128x128xbf16>, vector<2x128xf32> -> vector<2x128xf32>
    %23 = arith.addf %19, %22 : vector<2x128xf32>
    %24 = math.tanh %23 : vector<2x128xf32>
    %c2_i32 = arith.constant 2 : i32
    %25 = vector.broadcast %c2_i32 : i32 to vector<2x128xi32>
    %26 = arith.cmpi eq, %8, %25 : vector<2x128xi32>
    %27 = arith.select %26, %24, %18 : vector<2x128xi1>, vector<2x128xf32>
    %28 = vector.extract_strided_slice %5 {offsets = [4, 0], sizes = [2, 128], strides = [1, 1]} : vector<16x128xf32> to vector<2x128xf32>
    %29 = arith.truncf %24 : vector<2x128xf32> to vector<2x128xbf16>
    %c0_14 = arith.constant 0 : index
    %c0_15 = arith.constant 0 : index
    %30 = vector.load %arg3[%c0_14, %c0_15] : memref<128x128xbf16, #tpu.memory_space<vmem>>, vector<128x128xbf16>
    %cst_16 = arith.constant dense<0.000000e+00> : vector<2x128xf32>
    %31 = tpu.matmul %29, %30, %cst_16 {dimension_numbers = #tpu.dot_dimension_numbers<[1], [0], [0], [1], [0, 0, 1, 1], [], []>} : vector<2x128xbf16>, vector<128x128xbf16>, vector<2x128xf32> -> vector<2x128xf32>
    %32 = arith.addf %28, %31 : vector<2x128xf32>
    %33 = math.tanh %32 : vector<2x128xf32>
    %c3_i32 = arith.constant 3 : i32
    %34 = vector.broadcast %c3_i32 : i32 to vector<2x128xi32>
    %35 = arith.cmpi eq, %8, %34 : vector<2x128xi32>
    %36 = arith.select %35, %33, %27 : vector<2x128xi1>, vector<2x128xf32>
    %37 = vector.extract_strided_slice %5 {offsets = [6, 0], sizes = [2, 128], strides = [1, 1]} : vector<16x128xf32> to vector<2x128xf32>
    %38 = arith.truncf %33 : vector<2x128xf32> to vector<2x128xbf16>
    %c0_17 = arith.constant 0 : index
    %c0_18 = arith.constant 0 : index
    %39 = vector.load %arg3[%c0_17, %c0_18] : memref<128x128xbf16, #tpu.memory_space<vmem>>, vector<128x128xbf16>
    %cst_19 = arith.constant dense<0.000000e+00> : vector<2x128xf32>
    %40 = tpu.matmul %38, %39, %cst_19 {dimension_numbers = #tpu.dot_dimension_numbers<[1], [0], [0], [1], [0, 0, 1, 1], [], []>} : vector<2x128xbf16>, vector<128x128xbf16>, vector<2x128xf32> -> vector<2x128xf32>
    %41 = arith.addf %37, %40 : vector<2x128xf32>
    %42 = math.tanh %41 : vector<2x128xf32>
    %c4_i32 = arith.constant 4 : i32
    %43 = vector.broadcast %c4_i32 : i32 to vector<2x128xi32>
    %44 = arith.cmpi eq, %8, %43 : vector<2x128xi32>
    %45 = arith.select %44, %42, %36 : vector<2x128xi1>, vector<2x128xf32>
    %46 = vector.extract_strided_slice %5 {offsets = [8, 0], sizes = [2, 128], strides = [1, 1]} : vector<16x128xf32> to vector<2x128xf32>
    %47 = arith.truncf %42 : vector<2x128xf32> to vector<2x128xbf16>
    %c0_20 = arith.constant 0 : index
    %c0_21 = arith.constant 0 : index
    %48 = vector.load %arg3[%c0_20, %c0_21] : memref<128x128xbf16, #tpu.memory_space<vmem>>, vector<128x128xbf16>
    %cst_22 = arith.constant dense<0.000000e+00> : vector<2x128xf32>
    %49 = tpu.matmul %47, %48, %cst_22 {dimension_numbers = #tpu.dot_dimension_numbers<[1], [0], [0], [1], [0, 0, 1, 1], [], []>} : vector<2x128xbf16>, vector<128x128xbf16>, vector<2x128xf32> -> vector<2x128xf32>
    %50 = arith.addf %46, %49 : vector<2x128xf32>
    %51 = math.tanh %50 : vector<2x128xf32>
    %c5_i32 = arith.constant 5 : i32
    %52 = vector.broadcast %c5_i32 : i32 to vector<2x128xi32>
    %53 = arith.cmpi eq, %8, %52 : vector<2x128xi32>
    %54 = arith.select %53, %51, %45 : vector<2x128xi1>, vector<2x128xf32>
    %55 = vector.extract_strided_slice %5 {offsets = [10, 0], sizes = [2, 128], strides = [1, 1]} : vector<16x128xf32> to vector<2x128xf32>
    %56 = arith.truncf %51 : vector<2x128xf32> to vector<2x128xbf16>
    %c0_23 = arith.constant 0 : index
    %c0_24 = arith.constant 0 : index
    %57 = vector.load %arg3[%c0_23, %c0_24] : memref<128x128xbf16, #tpu.memory_space<vmem>>, vector<128x128xbf16>
    %cst_25 = arith.constant dense<0.000000e+00> : vector<2x128xf32>
    %58 = tpu.matmul %56, %57, %cst_25 {dimension_numbers = #tpu.dot_dimension_numbers<[1], [0], [0], [1], [0, 0, 1, 1], [], []>} : vector<2x128xbf16>, vector<128x128xbf16>, vector<2x128xf32> -> vector<2x128xf32>
    %59 = arith.addf %55, %58 : vector<2x128xf32>
    %60 = math.tanh %59 : vector<2x128xf32>
    %c6_i32 = arith.constant 6 : i32
    %61 = vector.broadcast %c6_i32 : i32 to vector<2x128xi32>
    %62 = arith.cmpi eq, %8, %61 : vector<2x128xi32>
    %63 = arith.select %62, %60, %54 : vector<2x128xi1>, vector<2x128xf32>
    %64 = vector.extract_strided_slice %5 {offsets = [12, 0], sizes = [2, 128], strides = [1, 1]} : vector<16x128xf32> to vector<2x128xf32>
    %65 = arith.truncf %60 : vector<2x128xf32> to vector<2x128xbf16>
    %c0_26 = arith.constant 0 : index
    %c0_27 = arith.constant 0 : index
    %66 = vector.load %arg3[%c0_26, %c0_27] : memref<128x128xbf16, #tpu.memory_space<vmem>>, vector<128x128xbf16>
    %cst_28 = arith.constant dense<0.000000e+00> : vector<2x128xf32>
    %67 = tpu.matmul %65, %66, %cst_28 {dimension_numbers = #tpu.dot_dimension_numbers<[1], [0], [0], [1], [0, 0, 1, 1], [], []>} : vector<2x128xbf16>, vector<128x128xbf16>, vector<2x128xf32> -> vector<2x128xf32>
    %68 = arith.addf %64, %67 : vector<2x128xf32>
    %69 = math.tanh %68 : vector<2x128xf32>
    %c7_i32 = arith.constant 7 : i32
    %70 = vector.broadcast %c7_i32 : i32 to vector<2x128xi32>
    %71 = arith.cmpi eq, %8, %70 : vector<2x128xi32>
    %72 = arith.select %71, %69, %63 : vector<2x128xi1>, vector<2x128xf32>
    %73 = vector.extract_strided_slice %5 {offsets = [14, 0], sizes = [2, 128], strides = [1, 1]} : vector<16x128xf32> to vector<2x128xf32>
    %74 = arith.truncf %69 : vector<2x128xf32> to vector<2x128xbf16>
    %c0_29 = arith.constant 0 : index
    %c0_30 = arith.constant 0 : index
    %75 = vector.load %arg3[%c0_29, %c0_30] : memref<128x128xbf16, #tpu.memory_space<vmem>>, vector<128x128xbf16>
    %cst_31 = arith.constant dense<0.000000e+00> : vector<2x128xf32>
    %76 = tpu.matmul %74, %75, %cst_31 {dimension_numbers = #tpu.dot_dimension_numbers<[1], [0], [0], [1], [0, 0, 1, 1], [], []>} : vector<2x128xbf16>, vector<128x128xbf16>, vector<2x128xf32> -> vector<2x128xf32>
    %77 = arith.addf %73, %76 : vector<2x128xf32>
    %78 = math.tanh %77 : vector<2x128xf32>
    %c8_i32 = arith.constant 8 : i32
    %79 = vector.broadcast %c8_i32 : i32 to vector<2x128xi32>
    %80 = arith.cmpi eq, %8, %79 : vector<2x128xi32>
    %81 = arith.select %80, %78, %72 : vector<2x128xi1>, vector<2x128xf32>
    %82 = arith.truncf %81 : vector<2x128xf32> to vector<2x128xbf16>
    %c0_32 = arith.constant 0 : index
    %c0_33 = arith.constant 0 : index
    %83 = vector.load %arg5[%c0_32, %c0_33] : memref<128x128xbf16, #tpu.memory_space<vmem>>, vector<128x128xbf16>
    %cst_34 = arith.constant dense<0.000000e+00> : vector<2x128xf32>
    %84 = tpu.matmul %82, %83, %cst_34 {dimension_numbers = #tpu.dot_dimension_numbers<[1], [0], [0], [1], [0, 0, 1, 1], [], []>} : vector<2x128xbf16>, vector<128x128xbf16>, vector<2x128xf32> -> vector<2x128xf32>
    %c0_35 = arith.constant 0 : index
    %c0_36 = arith.constant 0 : index
    %85 = vector.load %arg6[%c0_35, %c0_36] : memref<1x128xf32, #tpu.memory_space<vmem>>, vector<1x128xf32>
    %86 = vector.broadcast %85 : vector<1x128xf32> to vector<2x128xf32>
    %87 = arith.addf %84, %86 : vector<2x128xf32>
    %c0_37 = arith.constant 0 : index
    %c0_38 = arith.constant 0 : index
    %88 = vector.load %arg7[%c0_37, %c0_38] : memref<2x128xf32, #tpu.memory_space<vmem>>, vector<2x128xf32>
    tpu.vector_store %arg7[%c0_37, %c0_38], %87 {strides = array<i32>} : memref<2x128xf32, #tpu.memory_space<vmem>>, vector<2x128xf32>,
    return
  }
}

</mosaic_0001>

<llo_original>
// kernel: tpu_custom_call.1
$region0: #{tpu_custom_call.1}
  #allocation0 [shape = 'u32[]', space=smem, size = 0x4, offset = 0x4, fixed_abs, tag = 'smem constant byte address 0x4 - core index']
  #allocation1 [shape = 'u32[144,128]{1,0:T(1,128)}', space=vmem, size = 0x12000, scoped, tag = 'internal scratch']
  %s0 = inlined_call_operand.hbm [shape: bf16[16,300], index: 0, kind: input, shape index: {}]
  %s1 = inlined_call_operand.vmem [shape: s32[2,1], index: 1, kind: input, shape index: {}]
  %s2 = inlined_call_operand.hbm [shape: bf16[300,128], index: 2, kind: input, shape index: {}]
  %s3 = inlined_call_operand.hbm [shape: bf16[128,128], index: 3, kind: input, shape index: {}]
  %s4 = inlined_call_operand.vmem [shape: f32[1,128], index: 4, kind: input, shape index: {}]
  %s5 = inlined_call_operand.hbm [shape: bf16[128,128], index: 5, kind: input, shape index: {}]
  %s6 = inlined_call_operand.vmem [shape: f32[1,128], index: 6, kind: input, shape index: {}]
  %s7 = inlined_call_operand.hbm [shape: f32[2,128], index: 7, kind: output, shape index: {}]
  %s8 = sld [smem:[#allocation0]]
  $region54: #{tpu_custom_call.1} parent=0
    _
  %s10 = ssub.s32 1, %s8
  %s11 = scalar_select 0, %s10, %s8
  $region1: #{tpu_custom_call.1} parent=0
    #allocation2 [shape = 'u8[12288]{0}', space=vmem, size = 0x3000, scoped, tag = 'input window, operand 0, single buffered']
    #allocation3 [shape = 's32[1]{0}', space=sflag, size = 0x4, scoped, tag = 'scoped memory for tpu_custom_call.1']
    #allocation4 [shape = 's32[1]{0}', space=sflag, size = 0x4, scoped, tag = 'scoped memory for tpu_custom_call.1']
    #allocation5 [shape = 'u8[77824]{0}', space=vmem, size = 0x13000, scoped, tag = 'input window, operand 2, single buffered']
    #allocation6 [shape = 's32[1]{0}', space=sflag, size = 0x4, scoped, tag = 'scoped memory for tpu_custom_call.1']
    #allocation7 [shape = 'u8[32768]{0}', space=vmem, size = 0x8000, scoped, tag = 'input window, operand 3, single buffered']
    #allocation8 [shape = 'u8[32768]{0}', space=vmem, size = 0x8000, scoped, tag = 'input window, operand 5, single buffered']
    #allocation9 [shape = 's32[1]{0}', space=sflag, size = 0x4, scoped, tag = 'scoped memory for tpu_custom_call.1']
    #allocation10 [shape = 'u8[1024]{0}', space=vmem, size = 0x400, scoped, tag = 'output window, operand 0, single buffered']
    %12 = vsyncpa [#allocation3], 0
    %13 = vsyncpa [#allocation6], 0
    %14 = vsyncpa [#allocation9], 0
    %15 = vsyncpa [#allocation4], 0
    // Predicated region
    $region2: #{tpu_custom_call.1} parent=1 // pred_check
      _
    $region3: #{tpu_custom_call.1} parent=1 // pred_check_branch
      %17 = sbr.rel (0) target = $region5
    $region4: #{tpu_custom_call.1} parent=1 // pred_region
      %s19 = ssub.s32 384, 384
      %20 = vsyncadd [#allocation3], %s19
      %s21 = sshll.u32 [#allocation2], 4
      %s22 = int_to_ptr.vmem [resolvable:$true] %s21
      %27 = dma.hbm_to_vmem [thread:$0]  %s0, 384, %s22, [#allocation3], 192, 192, 12
    $region5: #{tpu_custom_call.1} parent=1 // pred_fallthru
      _
    // Predicated region
    $region6: #{tpu_custom_call.1} parent=1 // pred_check
      _
    $region7: #{tpu_custom_call.1} parent=1 // pred_check_branch
      %29 = sbr.rel (0) target = $region9
    $region8: #{tpu_custom_call.1} parent=1 // pred_region
      _
    $region9: #{tpu_custom_call.1} parent=1 // pred_fallthru
      _
    // Predicated region
    $region10: #{tpu_custom_call.1} parent=1 // pred_check
      _
    $region11: #{tpu_custom_call.1} parent=1 // pred_check_branch
      %31 = sbr.rel (0) target = $region13
    $region12: #{tpu_custom_call.1} parent=1 // pred_region
      %s33 = ssub.s32 2432, 2432
      %34 = vsyncadd [#allocation6], %s33
      %s35 = sshll.u32 [#allocation5], 4
      %s36 = int_to_ptr.vmem [resolvable:$true] %s35
      %41 = dma.hbm_to_vmem [thread:$0]  %s2, 2432, %s36, [#allocation6], 64, 64, 4
    $region13: #{tpu_custom_call.1} parent=1 // pred_fallthru
      _
    // Predicated region
    $region14: #{tpu_custom_call.1} parent=1 // pred_check
      _
    $region15: #{tpu_custom_call.1} parent=1 // pred_check_branch
      %43 = sbr.rel (0) target = $region17
    $region16: #{tpu_custom_call.1} parent=1 // pred_region
      %s45 = ssub.s32 1024, 1024
      %46 = vsyncadd [#allocation6], %s45
      %s47 = sshll.u32 [#allocation7], 4
      %s48 = int_to_ptr.vmem [resolvable:$true] %s47
      %53 = dma.hbm_to_vmem [thread:$0]  %s3, 1024, %s48, [#allocation6], 64, 64, 4
    $region17: #{tpu_custom_call.1} parent=1 // pred_fallthru
      _
    // Predicated region
    $region18: #{tpu_custom_call.1} parent=1 // pred_check
      _
    $region19: #{tpu_custom_call.1} parent=1 // pred_check_branch
      %55 = sbr.rel (0) target = $region21
    $region20: #{tpu_custom_call.1} parent=1 // pred_region
      _
    $region21: #{tpu_custom_call.1} parent=1 // pred_fallthru
      _
    // Predicated region
    $region22: #{tpu_custom_call.1} parent=1 // pred_check
      _
    $region23: #{tpu_custom_call.1} parent=1 // pred_check_branch
      %57 = sbr.rel (0) target = $region25
    $region24: #{tpu_custom_call.1} parent=1 // pred_region
      %s59 = ssub.s32 1024, 1024
      %60 = vsyncadd [#allocation9], %s59
      %s61 = sshll.u32 [#allocation8], 4
      %s62 = int_to_ptr.vmem [resolvable:$true] %s61
      %67 = dma.hbm_to_vmem [thread:$0]  %s5, 1024, %s62, [#allocation9], 64, 64, 4
    $region25: #{tpu_custom_call.1} parent=1 // pred_fallthru
      _
    // Predicated region
    $region26: #{tpu_custom_call.1} parent=1 // pred_check
      _
    $region27: #{tpu_custom_call.1} parent=1 // pred_check_branch
      %69 = sbr.rel (0) target = $region29
    $region28: #{tpu_custom_call.1} parent=1 // pred_region
      _
    $region29: #{tpu_custom_call.1} parent=1 // pred_fallthru
      _
    // Predicated region
    $region30: #{tpu_custom_call.1} parent=1 // pred_check
      _
    $region31: #{tpu_custom_call.1} parent=1 // pred_check_branch
      %71 = sbr.rel (0) target = $region33
    $region32: #{tpu_custom_call.1} parent=1 // pred_region
      %72 = dma.done [#allocation3], 384
    $region33: #{tpu_custom_call.1} parent=1 // pred_fallthru
      _
    // Predicated region
    $region34: #{tpu_custom_call.1} parent=1 // pred_check
      _
    $region35: #{tpu_custom_call.1} parent=1 // pred_check_branch
      %74 = sbr.rel (0) target = $region37
    $region36: #{tpu_custom_call.1} parent=1 // pred_region
      %75 = dma.done [#allocation6], 2432
    $region37: #{tpu_custom_call.1} parent=1 // pred_fallthru
      _
    // Predicated region
    $region38: #{tpu_custom_call.1} parent=1 // pred_check
      _
    $region39: #{tpu_custom_call.1} parent=1 // pred_check_branch
      %77 = sbr.rel (0) target = $region41
    $region40: #{tpu_custom_call.1} parent=1 // pred_region
      %78 = dma.done [#allocation6], 1024
    $region41: #{tpu_custom_call.1} parent=1 // pred_fallthru
      _
    // Predicated region
    $region42: #{tpu_custom_call.1} parent=1 // pred_check
      _
    $region43: #{tpu_custom_call.1} parent=1 // pred_check_branch
      %80 = sbr.rel (0) target = $region45
    $region44: #{tpu_custom_call.1} parent=1 // pred_region
      %81 = dma.done [#allocation9], 1024
    $region45: #{tpu_custom_call.1} parent=1 // pred_fallthru
      _
    %v83 = vld [vmem:[#allocation2] sm:$0xff]
    %v84 = vld [vmem:[#allocation2 + $0x8] sm:$0xf]
    %v85 = vld [vmem:[#allocation2 + $0xc] sm:$0xff]
    %v86 = vld [vmem:[#allocation2 + $0x14] sm:$0xf]
    %v87 = vld [vmem:[#allocation5] sm:$0xf]
    %v88 = vld [vmem:[#allocation5 + $0x4] sm:$0xf]
    %v89 = vld [vmem:[#allocation5 + $0x8] sm:$0xf]
    %v90 = vld [vmem:[#allocation5 + $0xc] sm:$0xf]
    %v91 = vld [vmem:[#allocation5 + $0x10] sm:$0xf]
    %v92 = vld [vmem:[#allocation5 + $0x14] sm:$0xf]
    %v93 = vld [vmem:[#allocation5 + $0x18] sm:$0xf]
    %v94 = vld [vmem:[#allocation5 + $0x1c] sm:$0xf]
    %v95 = vld [vmem:[#allocation5 + $0x20] sm:$0xf]
    %v96 = vld [vmem:[#allocation5 + $0x24] sm:$0xf]
    %v97 = vld [vmem:[#allocation5 + $0x28] sm:$0xf]
    %v98 = vld [vmem:[#allocation5 + $0x2c] sm:$0xf]
    %v99 = vld [vmem:[#allocation5 + $0x30] sm:$0xf]
    %v100 = vld [vmem:[#allocation5 + $0x34] sm:$0xf]
    %v101 = vld [vmem:[#allocation5 + $0x38] sm:$0xf]
    %v102 = vld [vmem:[#allocation5 + $0x3c] sm:$0xf]
    %v103 = vld [vmem:[#allocation5 + $0x40] sm:$0xf]
    %v104 = vld [vmem:[#allocation5 + $0x44] sm:$0xf]
    %v105 = vld [vmem:[#allocation5 + $0x48] sm:$0xf]
    %v106 = vld [vmem:[#allocation5 + $0x4c] sm:$0xf]
    %v107 = vld [vmem:[#allocation5 + $0x50] sm:$0xf]
    %v108 = vld [vmem:[#allocation5 + $0x54] sm:$0xf]
    %v109 = vld [vmem:[#allocation5 + $0x58] sm:$0xf]
    %v110 = vld [vmem:[#allocation5 + $0x5c] sm:$0xf]
    %v111 = vld [vmem:[#allocation5 + $0x60] sm:$0xf]
    %v112 = vld [vmem:[#allocation5 + $0x64] sm:$0xf]
    %v113 = vld [vmem:[#allocation5 + $0x68] sm:$0xf]
    %v114 = vld [vmem:[#allocation5 + $0x6c] sm:$0xf]
    %v115 = vld [vmem:[#allocation5 + $0x70] sm:$0xf]
    %v116 = vld [vmem:[#allocation5 + $0x74] sm:$0xf]
    %v117 = vld [vmem:[#allocation5 + $0x78] sm:$0xf]
    %v118 = vld [vmem:[#allocation5 + $0x7c] sm:$0xf]
    %v119 = vld [vmem:[#allocation5 + $0x80] sm:$0xf]
    %v120 = vld [vmem:[#allocation5 + $0x84] sm:$0xf]
    %v121 = vld [vmem:[#allocation5 + $0x88] sm:$0xf]
    %v122 = vld [vmem:[#allocation5 + $0x8c] sm:$0xf]
    %v123 = vld [vmem:[#allocation5 + $0x90] sm:$0xf]
    %v124 = vld [vmem:[#allocation5 + $0x94] sm:$0x3]
    %v125 = vld [vmem:[%s4] sm:$0x1]
    %v127 = vlaneseq
    %v128 = vshrl.u32 %v127, 7
    %v129 = vsub.s32 0, %v128
    %v130 = vrot.slane %v125, %v129
    %v136 = vunpack.c.l.b16 %v83
    %v137 = vunpack.c.h.b16 %v83
    %v138 = vunpack.c.l.b16 %v84
    %v139 = vunpack.c.l.b16 %v85
    %v140 = vunpack.c.h.b16 %v85
    %v141 = vunpack.c.l.b16 %v86
    %v142 = vpack.c.b16 %v139, %v136
    %v143 = vpack.c.b16 %v140, %v137
    %v144 = vpack.c.b16 %v141, %v138
    %v185 = vunpack.c.l.b16 %v87
    %v186 = vunpack.c.l.b16 %v88
    %v187 = vunpack.c.l.b16 %v89
    %v188 = vunpack.c.l.b16 %v90
    %v189 = vunpack.c.l.b16 %v91
    %v190 = vunpack.c.l.b16 %v92
    %v191 = vunpack.c.l.b16 %v93
    %v192 = vunpack.c.l.b16 %v94
    %v193 = vunpack.c.l.b16 %v95
    %v194 = vunpack.c.l.b16 %v96
    %v195 = vunpack.c.l.b16 %v97
    %v196 = vunpack.c.l.b16 %v98
    %v197 = vunpack.c.l.b16 %v99
    %v198 = vunpack.c.l.b16 %v100
    %v199 = vunpack.c.l.b16 %v101
    %v200 = vunpack.c.l.b16 %v102
    %v201 = vunpack.c.l.b16 %v103
    %v202 = vunpack.c.l.b16 %v104
    %v203 = vunpack.c.l.b16 %v105
    %v204 = vunpack.c.l.b16 %v106
    %v205 = vunpack.c.l.b16 %v107
    %v206 = vunpack.c.l.b16 %v108
    %v207 = vunpack.c.l.b16 %v109
    %v208 = vunpack.c.l.b16 %v110
    %v209 = vunpack.c.l.b16 %v111
    %v210 = vunpack.c.l.b16 %v112
    %v211 = vunpack.c.l.b16 %v113
    %v212 = vunpack.c.l.b16 %v114
    %v213 = vunpack.c.l.b16 %v115
    %v214 = vunpack.c.l.b16 %v116
    %v215 = vunpack.c.l.b16 %v117
    %v216 = vunpack.c.l.b16 %v118
    %v217 = vunpack.c.l.b16 %v119
    %v218 = vunpack.c.l.b16 %v120
    %v219 = vunpack.c.l.b16 %v121
    %v220 = vunpack.c.l.b16 %v122
    %v221 = vunpack.c.l.b16 %v123
    %v222 = vunpack.c.l.b16 %v124
    %v223 = vpack.c.b16 %v186, %v185
    %v224 = vpack.c.b16 %v188, %v187
    %v225 = vpack.c.b16 %v190, %v189
    %v226 = vpack.c.b16 %v192, %v191
    %v227 = vpack.c.b16 %v194, %v193
    %v228 = vpack.c.b16 %v196, %v195
    %v229 = vpack.c.b16 %v198, %v197
    %v230 = vpack.c.b16 %v200, %v199
    %v231 = vpack.c.b16 %v202, %v201
    %v232 = vpack.c.b16 %v204, %v203
    %v233 = vpack.c.b16 %v206, %v205
    %v234 = vpack.c.b16 %v208, %v207
    %v235 = vpack.c.b16 %v210, %v209
    %v236 = vpack.c.b16 %v212, %v211
    %v237 = vpack.c.b16 %v214, %v213
    %v238 = vpack.c.b16 %v216, %v215
    %v239 = vpack.c.b16 %v218, %v217
    %v240 = vpack.c.b16 %v220, %v219
    %v241 = vpack.c.b16 %v222, %v221
    %vm260 = vcmask 359424
    %v262 = vsel %vm260, %v144, 0
    %vm264 = vcmask 1045504
    %v266 = vsel %vm264, %v241, 0
    %268 = vmatprep.subr.bf16.mxu0 0
    %269 = vmatpush1.bf16.msra.mxu0 %v230
    %270 = vmatprep.subr.bf16.mxu0 0
    %271 = vmatpush1.bf16.msra.mxu0 %v229
    %272 = vmatprep.subr.bf16.mxu0 0
    %273 = vmatpush1.bf16.msra.mxu0 %v228
    %274 = vmatprep.subr.bf16.mxu0 0
    %275 = vmatpush1.bf16.msra.mxu0 %v227
    %276 = vmatprep.subr.bf16.mxu0 0
    %277 = vmatpush1.bf16.msra.mxu0 %v226
    %278 = vmatprep.subr.bf16.mxu0 0
    %279 = vmatpush1.bf16.msra.mxu0 %v225
    %280 = vmatprep.subr.bf16.mxu0 0
    %281 = vmatpush1.bf16.msra.mxu0 %v224
    %282 = vmatprep.subr.bf16.mxu0 0
    %283 = vmatpush1.bf16.msra.mxu0 %v223
    %284 = vmatprep.subr.bf16.mxu0 0
    %285 = vmatpush2.bf16.msra.mxu0 %v238
    %286 = vmatprep.subr.bf16.mxu0 0
    %287 = vmatpush2.bf16.msra.mxu0 %v237
    %288 = vmatprep.subr.bf16.mxu0 0
    %289 = vmatpush2.bf16.msra.mxu0 %v236
    %290 = vmatprep.subr.bf16.mxu0 0
    %291 = vmatpush2.bf16.msra.mxu0 %v235
    %292 = vmatprep.subr.bf16.mxu0 0
    %293 = vmatpush2.bf16.msra.mxu0 %v234
    %294 = vmatprep.subr.bf16.mxu0 0
    %295 = vmatpush2.bf16.msra.mxu0 %v233
    %296 = vmatprep.subr.bf16.mxu0 0
    %297 = vmatpush2.bf16.msra.mxu0 %v232
    %298 = vmatprep.subr.bf16.mxu0 0
    %299 = vmatpush2.bf16.msra.mxu0 %v231
    %300 = vmatprep.mubr.bf16.mxu0 %v143
    %301 = vmatmul.mubr.bf16.gmra.mxu0 %v142
    %v302 = vpop.f32.mrf.mxu0
    %v303 = vadd.f32 %v130, %v302
    %v304 = vpop.f32.mrf.mxu0
    %v305 = vpop.f32.mrf.mxu0
    %v306 = vadd.f32 %v130, %v305
    %v307 = vpop.f32.mrf.mxu0
    %308 = vdwg.mxu0
    %309 = vmatprep.subr.bf16.mxu0 0
    %310 = vmatpush1.bf16.msra.mxu0 0
    %311 = vmatprep.subr.bf16.mxu0 0
    %312 = vmatpush1.bf16.msra.mxu0 0
    %313 = vmatprep.subr.bf16.mxu0 0
    %314 = vmatpush1.bf16.msra.mxu0 0
    %315 = vmatprep.subr.bf16.mxu0 0
    %316 = vmatpush1.bf16.msra.mxu0 0
    %317 = vmatprep.subr.bf16.mxu0 0
    %318 = vmatpush1.bf16.msra.mxu0 0
    %319 = vmatprep.subr.bf16.mxu0 0
    %320 = vmatpush1.bf16.msra.mxu0 %v266
    %321 = vmatprep.subr.bf16.mxu0 0
    %322 = vmatpush1.bf16.msra.mxu0 %v240
    %323 = vmatprep.subr.bf16.mxu0 0
    %324 = vmatpush1.bf16.msra.mxu0 %v239
    %325 = vmatprep.subr.bf16.mxu0 0
    %326 = vmatpush2.bf16.msra.mxu0 0
    %327 = vmatprep.subr.bf16.mxu0 0
    %328 = vmatpush2.bf16.msra.mxu0 0
    %329 = vmatprep.subr.bf16.mxu0 0
    %330 = vmatpush2.bf16.msra.mxu0 0
    %331 = vmatprep.subr.bf16.mxu0 0
    %332 = vmatpush2.bf16.msra.mxu0 0
    %333 = vmatprep.subr.bf16.mxu0 0
    %334 = vmatpush2.bf16.msra.mxu0 0
    %335 = vmatprep.subr.bf16.mxu0 0
    %336 = vmatpush2.bf16.msra.mxu0 0
    %337 = vmatprep.subr.bf16.mxu0 0
    %338 = vmatpush2.bf16.msra.mxu0 0
    %339 = vmatprep.subr.bf16.mxu0 0
    %340 = vmatpush2.bf16.msra.mxu0 0
    %341 = vmatprep.mubr.bf16.mxu0 0
    %342 = vmatmul.mubr.bf16.gmra.mxu0 %v262
    %v343 = vpop.f32.mrf.mxu0
    %v344 = vadd.f32 %v303, %v343
    %v345 = vpop.f32.mrf.mxu0
    %v346 = vpop.f32.mrf.mxu0
    %v347 = vadd.f32 %v306, %v346
    %v348 = vpop.f32.mrf.mxu0
    %349 = vdwg.mxu0
    %v350 = vld [vmem:[%s1] sm:$0x3]
    %351 = vset.pattern.permute.xlu0 0
    %352 = vperm.xlu0 %351, %v350
    %v353 = vpop.permute.xlu0 %352
    %v354 = vld [vmem:[#allocation7] sm:$0xf]
    %v355 = vld [vmem:[#allocation7 + $0x4] sm:$0xf]
    %v356 = vld [vmem:[#allocation7 + $0x8] sm:$0xf]
    %v357 = vld [vmem:[#allocation7 + $0xc] sm:$0xf]
    %v358 = vld [vmem:[#allocation7 + $0x10] sm:$0xf]
    %v359 = vld [vmem:[#allocation7 + $0x14] sm:$0xf]
    %v360 = vld [vmem:[#allocation7 + $0x18] sm:$0xf]
    %v361 = vld [vmem:[#allocation7 + $0x1c] sm:$0xf]
    %v362 = vld [vmem:[#allocation7 + $0x20] sm:$0xf]
    %v363 = vld [vmem:[#allocation7 + $0x24] sm:$0xf]
    %v364 = vld [vmem:[#allocation7 + $0x28] sm:$0xf]
    %v365 = vld [vmem:[#allocation7 + $0x2c] sm:$0xf]
    %v366 = vld [vmem:[#allocation7 + $0x30] sm:$0xf]
    %v367 = vld [vmem:[#allocation7 + $0x34] sm:$0xf]
    %v368 = vld [vmem:[#allocation7 + $0x38] sm:$0xf]
    %v369 = vld [vmem:[#allocation7 + $0x3c] sm:$0xf]
    %v386 = vunpack.c.l.b16 %v354
    %v387 = vunpack.c.l.b16 %v355
    %v388 = vunpack.c.l.b16 %v356
    %v389 = vunpack.c.l.b16 %v357
    %v390 = vunpack.c.l.b16 %v358
    %v391 = vunpack.c.l.b16 %v359
    %v392 = vunpack.c.l.b16 %v360
    %v393 = vunpack.c.l.b16 %v361
    %v394 = vunpack.c.l.b16 %v362
    %v395 = vunpack.c.l.b16 %v363
    %v396 = vunpack.c.l.b16 %v364
    %v397 = vunpack.c.l.b16 %v365
    %v398 = vunpack.c.l.b16 %v366
    %v399 = vunpack.c.l.b16 %v367
    %v400 = vunpack.c.l.b16 %v368
    %v401 = vunpack.c.l.b16 %v369
    %v402 = vpack.c.b16 %v387, %v386
    %v403 = vpack.c.b16 %v389, %v388
    %v404 = vpack.c.b16 %v391, %v390
    %v405 = vpack.c.b16 %v393, %v392
    %v406 = vpack.c.b16 %v395, %v394
    %v407 = vpack.c.b16 %v397, %v396
    %v408 = vpack.c.b16 %v399, %v398
    %v409 = vpack.c.b16 %v401, %v400
    %418 = vmatprep.subr.bf16.mxu0 0
    %419 = vmatpush1.bf16.msra.mxu0 %v409
    %420 = vmatprep.subr.bf16.mxu0 0
    %421 = vmatpush1.bf16.msra.mxu0 %v408
    %422 = vmatprep.subr.bf16.mxu0 0
    %423 = vmatpush1.bf16.msra.mxu0 %v407
    %424 = vmatprep.subr.bf16.mxu0 0
    %425 = vmatpush1.bf16.msra.mxu0 %v406
    %426 = vmatprep.subr.bf16.mxu0 0
    %427 = vmatpush1.bf16.msra.mxu0 %v405
    %428 = vmatprep.subr.bf16.mxu0 0
    %429 = vmatpush1.bf16.msra.mxu0 %v404
    %430 = vmatprep.subr.bf16.mxu0 0
    %431 = vmatpush1.bf16.msra.mxu0 %v403
    %432 = vmatprep.subr.bf16.mxu0 0
    %433 = vmatpush1.bf16.msra.mxu0 %v402
    %434 = vmatprep.subr.bf16.mxu0 0
    %435 = vmatpush2.bf16.msra.mxu0 0
    %436 = vmatprep.subr.bf16.mxu0 0
    %437 = vmatpush2.bf16.msra.mxu0 0
    %438 = vmatprep.subr.bf16.mxu0 0
    %439 = vmatpush2.bf16.msra.mxu0 0
    %440 = vmatprep.subr.bf16.mxu0 0
    %441 = vmatpush2.bf16.msra.mxu0 0
    %442 = vmatprep.subr.bf16.mxu0 0
    %443 = vmatpush2.bf16.msra.mxu0 0
    %444 = vmatprep.subr.bf16.mxu0 0
    %445 = vmatpush2.bf16.msra.mxu0 0
    %446 = vmatprep.subr.bf16.mxu0 0
    %447 = vmatpush2.bf16.msra.mxu0 0
    %448 = vmatprep.subr.bf16.mxu0 0
    %449 = vmatpush2.bf16.msra.mxu0 0
    %450 = vmatprep.mubr.bf16.mxu0 0
    %451 = vmatmul.mubr.bf16.gmra.mxu0 0
    %v452 = vpop.f32.mrf.mxu0
    %v453 = vadd.f32 0.0, %v452
    %v454 = vpop.f32.mrf.mxu0
    %v455 = vpop.f32.mrf.mxu0
    %v456 = vpop.f32.mrf.mxu0
    %457 = vdwg.mxu0
    %v458 = vadd.f32 %v344, %v453
    %v459 = vtanh.pop %v458
    %vm460 = vcmp.eq.s32.totalorder %v353, 1
    %v461 = vsel %vm460, %v459, 0.0
    %v462 = vpack.c.bf16 %v459, %v459
    %463 = vmatprep.subr.bf16.mxu0 0
    %464 = vmatpush1.bf16.msra.mxu0 %v409
    %465 = vmatprep.subr.bf16.mxu0 0
    %466 = vmatpush1.bf16.msra.mxu0 %v408
    %467 = vmatprep.subr.bf16.mxu0 0
    %468 = vmatpush1.bf16.msra.mxu0 %v407
    %469 = vmatprep.subr.bf16.mxu0 0
    %470 = vmatpush1.bf16.msra.mxu0 %v406
    %471 = vmatprep.subr.bf16.mxu0 0
    %472 = vmatpush1.bf16.msra.mxu0 %v405
    %473 = vmatprep.subr.bf16.mxu0 0
    %474 = vmatpush1.bf16.msra.mxu0 %v404
    %475 = vmatprep.subr.bf16.mxu0 0
    %476 = vmatpush1.bf16.msra.mxu0 %v403
    %477 = vmatprep.subr.bf16.mxu0 0
    %478 = vmatpush1.bf16.msra.mxu0 %v402
    %479 = vmatprep.subr.bf16.mxu0 0
    %480 = vmatpush2.bf16.msra.mxu0 0
    %481 = vmatprep.subr.bf16.mxu0 0
    %482 = vmatpush2.bf16.msra.mxu0 0
    %483 = vmatprep.subr.bf16.mxu0 0
    %484 = vmatpush2.bf16.msra.mxu0 0
    %485 = vmatprep.subr.bf16.mxu0 0
    %486 = vmatpush2.bf16.msra.mxu0 0
    %487 = vmatprep.subr.bf16.mxu0 0
    %488 = vmatpush2.bf16.msra.mxu0 0
    %489 = vmatprep.subr.bf16.mxu0 0
    %490 = vmatpush2.bf16.msra.mxu0 0
    %491 = vmatprep.subr.bf16.mxu0 0
    %492 = vmatpush2.bf16.msra.mxu0 0
    %493 = vmatprep.subr.bf16.mxu0 0
    %494 = vmatpush2.bf16.msra.mxu0 0
    %495 = vmatprep.mubr.bf16.mxu0 0
    %496 = vmatmul.mubr.bf16.gmra.mxu0 %v462
    %v497 = vpop.f32.mrf.mxu0
    %v498 = vadd.f32 0.0, %v497
    %v499 = vpop.f32.mrf.mxu0
    %v500 = vpop.f32.mrf.mxu0
    %v501 = vpop.f32.mrf.mxu0
    %502 = vdwg.mxu0
    %v504 = vrot.slane %v498, 6
    %v506 = vadd.f32 %v344, %v504
    %v507 = vtanh.pop %v506
    %vm508 = vcmp.eq.s32.totalorder %v353, 2
    %v510 = vrot.slane %v507, 2
    %v512 = vsel %vm508, %v510, %v461
    %v513 = vpack.c.bf16 %v507, %v507
    %v515 = vrot.slane %v513, 1
    %517 = vmatprep.subr.bf16.mxu0 0
    %518 = vmatpush1.bf16.msra.mxu0 %v409
    %519 = vmatprep.subr.bf16.mxu0 0
    %520 = vmatpush1.bf16.msra.mxu0 %v408
    %521 = vmatprep.subr.bf16.mxu0 0
    %522 = vmatpush1.bf16.msra.mxu0 %v407
    %523 = vmatprep.subr.bf16.mxu0 0
    %524 = vmatpush1.bf16.msra.mxu0 %v406
    %525 = vmatprep.subr.bf16.mxu0 0
    %526 = vmatpush1.bf16.msra.mxu0 %v405
    %527 = vmatprep.subr.bf16.mxu0 0
    %528 = vmatpush1.bf16.msra.mxu0 %v404
    %529 = vmatprep.subr.bf16.mxu0 0
    %530 = vmatpush1.bf16.msra.mxu0 %v403
    %531 = vmatprep.subr.bf16.mxu0 0
    %532 = vmatpush1.bf16.msra.mxu0 %v402
    %533 = vmatprep.subr.bf16.mxu0 0
    %534 = vmatpush2.bf16.msra.mxu0 0
    %535 = vmatprep.subr.bf16.mxu0 0
    %536 = vmatpush2.bf16.msra.mxu0 0
    %537 = vmatprep.subr.bf16.mxu0 0
    %538 = vmatpush2.bf16.msra.mxu0 0
    %539 = vmatprep.subr.bf16.mxu0 0
    %540 = vmatpush2.bf16.msra.mxu0 0
    %541 = vmatprep.subr.bf16.mxu0 0
    %542 = vmatpush2.bf16.msra.mxu0 0
    %543 = vmatprep.subr.bf16.mxu0 0
    %544 = vmatpush2.bf16.msra.mxu0 0
    %545 = vmatprep.subr.bf16.mxu0 0
    %546 = vmatpush2.bf16.msra.mxu0 0
    %547 = vmatprep.subr.bf16.mxu0 0
    %548 = vmatpush2.bf16.msra.mxu0 0
    %549 = vmatprep.mubr.bf16.mxu0 0
    %550 = vmatmul.mubr.bf16.gmra.mxu0 %v515
    %v551 = vpop.f32.mrf.mxu0
    %v552 = vadd.f32 0.0, %v551
    %v553 = vpop.f32.mrf.mxu0
    %v554 = vpop.f32.mrf.mxu0
    %v555 = vpop.f32.mrf.mxu0
    %556 = vdwg.mxu0
    %v558 = vrot.slane %v552, 4
    %v560 = vadd.f32 %v344, %v558
    %v561 = vtanh.pop %v560
    %vm562 = vcmp.eq.s32.totalorder %v353, 3
    %v564 = vrot.slane %v561, 4
    %v566 = vsel %vm562, %v564, %v512
    %v567 = vpack.c.bf16 %v561, %v561
    %v569 = vrot.slane %v567, 2
    %571 = vmatprep.subr.bf16.mxu0 0
    %572 = vmatpush1.bf16.msra.mxu0 %v409
    %573 = vmatprep.subr.bf16.mxu0 0
    %574 = vmatpush1.bf16.msra.mxu0 %v408
    %575 = vmatprep.subr.bf16.mxu0 0
    %576 = vmatpush1.bf16.msra.mxu0 %v407
    %577 = vmatprep.subr.bf16.mxu0 0
    %578 = vmatpush1.bf16.msra.mxu0 %v406
    %579 = vmatprep.subr.bf16.mxu0 0
    %580 = vmatpush1.bf16.msra.mxu0 %v405
    %581 = vmatprep.subr.bf16.mxu0 0
    %582 = vmatpush1.bf16.msra.mxu0 %v404
    %583 = vmatprep.subr.bf16.mxu0 0
    %584 = vmatpush1.bf16.msra.mxu0 %v403
    %585 = vmatprep.subr.bf16.mxu0 0
    %586 = vmatpush1.bf16.msra.mxu0 %v402
    %587 = vmatprep.subr.bf16.mxu0 0
    %588 = vmatpush2.bf16.msra.mxu0 0
    %589 = vmatprep.subr.bf16.mxu0 0
    %590 = vmatpush2.bf16.msra.mxu0 0
    %591 = vmatprep.subr.bf16.mxu0 0
    %592 = vmatpush2.bf16.msra.mxu0 0
    %593 = vmatprep.subr.bf16.mxu0 0
    %594 = vmatpush2.bf16.msra.mxu0 0
    %595 = vmatprep.subr.bf16.mxu0 0
    %596 = vmatpush2.bf16.msra.mxu0 0
    %597 = vmatprep.subr.bf16.mxu0 0
    %598 = vmatpush2.bf16.msra.mxu0 0
    %599 = vmatprep.subr.bf16.mxu0 0
    %600 = vmatpush2.bf16.msra.mxu0 0
    %601 = vmatprep.subr.bf16.mxu0 0
    %602 = vmatpush2.bf16.msra.mxu0 0
    %603 = vmatprep.mubr.bf16.mxu0 0
    %604 = vmatmul.mubr.bf16.gmra.mxu0 %v569
    %v605 = vpop.f32.mrf.mxu0
    %v606 = vadd.f32 0.0, %v605
    %v607 = vpop.f32.mrf.mxu0
    %v608 = vpop.f32.mrf.mxu0
    %v609 = vpop.f32.mrf.mxu0
    %610 = vdwg.mxu0
    %v612 = vrot.slane %v606, 2
    %v614 = vadd.f32 %v344, %v612
    %v615 = vtanh.pop %v614
    %vm616 = vcmp.eq.s32.totalorder %v353, 4
    %v618 = vrot.slane %v615, 6
    %v620 = vsel %vm616, %v618, %v566
    %v621 = vpack.c.bf16 %v615, %v615
    %v623 = vrot.slane %v621, 3
    %625 = vmatprep.subr.bf16.mxu0 0
    %626 = vmatpush1.bf16.msra.mxu0 %v409
    %627 = vmatprep.subr.bf16.mxu0 0
    %628 = vmatpush1.bf16.msra.mxu0 %v408
    %629 = vmatprep.subr.bf16.mxu0 0
    %630 = vmatpush1.bf16.msra.mxu0 %v407
    %631 = vmatprep.subr.bf16.mxu0 0
    %632 = vmatpush1.bf16.msra.mxu0 %v406
    %633 = vmatprep.subr.bf16.mxu0 0
    %634 = vmatpush1.bf16.msra.mxu0 %v405
    %635 = vmatprep.subr.bf16.mxu0 0
    %636 = vmatpush1.bf16.msra.mxu0 %v404
    %637 = vmatprep.subr.bf16.mxu0 0
    %638 = vmatpush1.bf16.msra.mxu0 %v403
    %639 = vmatprep.subr.bf16.mxu0 0
    %640 = vmatpush1.bf16.msra.mxu0 %v402
    %641 = vmatprep.subr.bf16.mxu0 0
    %642 = vmatpush2.bf16.msra.mxu0 0
    %643 = vmatprep.subr.bf16.mxu0 0
    %644 = vmatpush2.bf16.msra.mxu0 0
    %645 = vmatprep.subr.bf16.mxu0 0
    %646 = vmatpush2.bf16.msra.mxu0 0
    %647 = vmatprep.subr.bf16.mxu0 0
    %648 = vmatpush2.bf16.msra.mxu0 0
    %649 = vmatprep.subr.bf16.mxu0 0
    %650 = vmatpush2.bf16.msra.mxu0 0
    %651 = vmatprep.subr.bf16.mxu0 0
    %652 = vmatpush2.bf16.msra.mxu0 0
    %653 = vmatprep.subr.bf16.mxu0 0
    %654 = vmatpush2.bf16.msra.mxu0 0
    %655 = vmatprep.subr.bf16.mxu0 0
    %656 = vmatpush2.bf16.msra.mxu0 0
    %657 = vmatprep.mubr.bf16.mxu0 0
    %658 = vmatmul.mubr.bf16.gmra.mxu0 %v623
    %v659 = vpop.f32.mrf.mxu0
    %v660 = vadd.f32 0.0, %v659
    %v661 = vpop.f32.mrf.mxu0
    %v662 = vpop.f32.mrf.mxu0
    %v663 = vpop.f32.mrf.mxu0
    %664 = vdwg.mxu0
    %v665 = vadd.f32 %v347, %v660
    %v666 = vtanh.pop %v665
    %vm667 = vcmp.eq.s32.totalorder %v353, 5
    %v668 = vsel %vm667, %v666, %v620
    %v669 = vpack.c.bf16 %v666, %v666
    %670 = vmatprep.subr.bf16.mxu0 0
    %671 = vmatpush1.bf16.msra.mxu0 %v409
    %672 = vmatprep.subr.bf16.mxu0 0
    %673 = vmatpush1.bf16.msra.mxu0 %v408
    %674 = vmatprep.subr.bf16.mxu0 0
    %675 = vmatpush1.bf16.msra.mxu0 %v407
    %676 = vmatprep.subr.bf16.mxu0 0
    %677 = vmatpush1.bf16.msra.mxu0 %v406
    %678 = vmatprep.subr.bf16.mxu0 0
    %679 = vmatpush1.bf16.msra.mxu0 %v405
    %680 = vmatprep.subr.bf16.mxu0 0
    %681 = vmatpush1.bf16.msra.mxu0 %v404
    %682 = vmatprep.subr.bf16.mxu0 0
    %683 = vmatpush1.bf16.msra.mxu0 %v403
    %684 = vmatprep.subr.bf16.mxu0 0
    %685 = vmatpush1.bf16.msra.mxu0 %v402
    %686 = vmatprep.subr.bf16.mxu0 0
    %687 = vmatpush2.bf16.msra.mxu0 0
    %688 = vmatprep.subr.bf16.mxu0 0
    %689 = vmatpush2.bf16.msra.mxu0 0
    %690 = vmatprep.subr.bf16.mxu0 0
    %691 = vmatpush2.bf16.msra.mxu0 0
    %692 = vmatprep.subr.bf16.mxu0 0
    %693 = vmatpush2.bf16.msra.mxu0 0
    %694 = vmatprep.subr.bf16.mxu0 0
    %695 = vmatpush2.bf16.msra.mxu0 0
    %696 = vmatprep.subr.bf16.mxu0 0
    %697 = vmatpush2.bf16.msra.mxu0 0
    %698 = vmatprep.subr.bf16.mxu0 0
    %699 = vmatpush2.bf16.msra.mxu0 0
    %700 = vmatprep.subr.bf16.mxu0 0
    %701 = vmatpush2.bf16.msra.mxu0 0
    %702 = vmatprep.mubr.bf16.mxu0 0
    %703 = vmatmul.mubr.bf16.gmra.mxu0 %v669
    %v704 = vpop.f32.mrf.mxu0
    %v705 = vadd.f32 0.0, %v704
    %v706 = vpop.f32.mrf.mxu0
    %v707 = vpop.f32.mrf.mxu0
    %v708 = vpop.f32.mrf.mxu0
    %709 = vdwg.mxu0
    %v711 = vrot.slane %v705, 6
    %v713 = vadd.f32 %v347, %v711
    %v714 = vtanh.pop %v713
    %vm715 = vcmp.eq.s32.totalorder %v353, 6
    %v717 = vrot.slane %v714, 2
    %v719 = vsel %vm715, %v717, %v668
    %v720 = vpack.c.bf16 %v714, %v714
    %v722 = vrot.slane %v720, 1
    %724 = vmatprep.subr.bf16.mxu0 0
    %725 = vmatpush1.bf16.msra.mxu0 %v409
    %726 = vmatprep.subr.bf16.mxu0 0
    %727 = vmatpush1.bf16.msra.mxu0 %v408
    %728 = vmatprep.subr.bf16.mxu0 0
    %729 = vmatpush1.bf16.msra.mxu0 %v407
    %730 = vmatprep.subr.bf16.mxu0 0
    %731 = vmatpush1.bf16.msra.mxu0 %v406
    %732 = vmatprep.subr.bf16.mxu0 0
    %733 = vmatpush1.bf16.msra.mxu0 %v405
    %734 = vmatprep.subr.bf16.mxu0 0
    %735 = vmatpush1.bf16.msra.mxu0 %v404
    %736 = vmatprep.subr.bf16.mxu0 0
    %737 = vmatpush1.bf16.msra.mxu0 %v403
    %738 = vmatprep.subr.bf16.mxu0 0
    %739 = vmatpush1.bf16.msra.mxu0 %v402
    %740 = vmatprep.subr.bf16.mxu0 0
    %741 = vmatpush2.bf16.msra.mxu0 0
    %742 = vmatprep.subr.bf16.mxu0 0
    %743 = vmatpush2.bf16.msra.mxu0 0
    %744 = vmatprep.subr.bf16.mxu0 0
    %745 = vmatpush2.bf16.msra.mxu0 0
    %746 = vmatprep.subr.bf16.mxu0 0
    %747 = vmatpush2.bf16.msra.mxu0 0
    %748 = vmatprep.subr.bf16.mxu0 0
    %749 = vmatpush2.bf16.msra.mxu0 0
    %750 = vmatprep.subr.bf16.mxu0 0
    %751 = vmatpush2.bf16.msra.mxu0 0
    %752 = vmatprep.subr.bf16.mxu0 0
    %753 = vmatpush2.bf16.msra.mxu0 0
    %754 = vmatprep.subr.bf16.mxu0 0
    %755 = vmatpush2.bf16.msra.mxu0 0
    %756 = vmatprep.mubr.bf16.mxu0 0
    %757 = vmatmul.mubr.bf16.gmra.mxu0 %v722
    %v758 = vpop.f32.mrf.mxu0
    %v759 = vadd.f32 0.0, %v758
    %v760 = vpop.f32.mrf.mxu0
    %v761 = vpop.f32.mrf.mxu0
    %v762 = vpop.f32.mrf.mxu0
    %763 = vdwg.mxu0
    %v765 = vrot.slane %v759, 4
    %v767 = vadd.f32 %v347, %v765
    %v768 = vtanh.pop %v767
    %vm769 = vcmp.eq.s32.totalorder %v353, 7
    %v771 = vrot.slane %v768, 4
    %v773 = vsel %vm769, %v771, %v719
    %v774 = vpack.c.bf16 %v768, %v768
    %v776 = vrot.slane %v774, 2
    %778 = vmatprep.subr.bf16.mxu0 0
    %779 = vmatpush1.bf16.msra.mxu0 %v409
    %780 = vmatprep.subr.bf16.mxu0 0
    %781 = vmatpush1.bf16.msra.mxu0 %v408
    %782 = vmatprep.subr.bf16.mxu0 0
    %783 = vmatpush1.bf16.msra.mxu0 %v407
    %784 = vmatprep.subr.bf16.mxu0 0
    %785 = vmatpush1.bf16.msra.mxu0 %v406
    %786 = vmatprep.subr.bf16.mxu0 0
    %787 = vmatpush1.bf16.msra.mxu0 %v405
    %788 = vmatprep.subr.bf16.mxu0 0
    %789 = vmatpush1.bf16.msra.mxu0 %v404
    %790 = vmatprep.subr.bf16.mxu0 0
    %791 = vmatpush1.bf16.msra.mxu0 %v403
    %792 = vmatprep.subr.bf16.mxu0 0
    %793 = vmatpush1.bf16.msra.mxu0 %v402
    %794 = vmatprep.subr.bf16.mxu0 0
    %795 = vmatpush2.bf16.msra.mxu0 0
    %796 = vmatprep.subr.bf16.mxu0 0
    %797 = vmatpush2.bf16.msra.mxu0 0
    %798 = vmatprep.subr.bf16.mxu0 0
    %799 = vmatpush2.bf16.msra.mxu0 0
    %800 = vmatprep.subr.bf16.mxu0 0
    %801 = vmatpush2.bf16.msra.mxu0 0
    %802 = vmatprep.subr.bf16.mxu0 0
    %803 = vmatpush2.bf16.msra.mxu0 0
    %804 = vmatprep.subr.bf16.mxu0 0
    %805 = vmatpush2.bf16.msra.mxu0 0
    %806 = vmatprep.subr.bf16.mxu0 0
    %807 = vmatpush2.bf16.msra.mxu0 0
    %808 = vmatprep.subr.bf16.mxu0 0
    %809 = vmatpush2.bf16.msra.mxu0 0
    %810 = vmatprep.mubr.bf16.mxu0 0
    %811 = vmatmul.mubr.bf16.gmra.mxu0 %v776
    %v812 = vpop.f32.mrf.mxu0
    %v813 = vadd.f32 0.0, %v812
    %v814 = vpop.f32.mrf.mxu0
    %v815 = vpop.f32.mrf.mxu0
    %v816 = vpop.f32.mrf.mxu0
    %817 = vdwg.mxu0
    %v819 = vrot.slane %v813, 2
    %v821 = vadd.f32 %v347, %v819
    %v822 = vtanh.pop %v821
    %vm823 = vcmp.eq.s32.totalorder %v353, 8
    %v825 = vrot.slane %v822, 6
    %v827 = vsel %vm823, %v825, %v773
    %v828 = vpack.c.bf16 %v827, %v827
    %v829 = vld [vmem:[#allocation8] sm:$0xf]
    %v830 = vld [vmem:[#allocation8 + $0x4] sm:$0xf]
    %v831 = vld [vmem:[#allocation8 + $0x8] sm:$0xf]
    %v832 = vld [vmem:[#allocation8 + $0xc] sm:$0xf]
    %v833 = vld [vmem:[#allocation8 + $0x10] sm:$0xf]
    %v834 = vld [vmem:[#allocation8 + $0x14] sm:$0xf]
    %v835 = vld [vmem:[#allocation8 + $0x18] sm:$0xf]
    %v836 = vld [vmem:[#allocation8 + $0x1c] sm:$0xf]
    %v837 = vld [vmem:[#allocation8 + $0x20] sm:$0xf]
    %v838 = vld [vmem:[#allocation8 + $0x24] sm:$0xf]
    %v839 = vld [vmem:[#allocation8 + $0x28] sm:$0xf]
    %v840 = vld [vmem:[#allocation8 + $0x2c] sm:$0xf]
    %v841 = vld [vmem:[#allocation8 + $0x30] sm:$0xf]
    %v842 = vld [vmem:[#allocation8 + $0x34] sm:$0xf]
    %v843 = vld [vmem:[#allocation8 + $0x38] sm:$0xf]
    %v844 = vld [vmem:[#allocation8 + $0x3c] sm:$0xf]
    %v845 = vld [vmem:[%s6] sm:$0x1]
    %v847 = vlaneseq
    %v848 = vshrl.u32 %v847, 7
    %v849 = vsub.s32 0, %v848
    %v850 = vrot.slane %v845, %v849
    %v868 = vunpack.c.l.b16 %v829
    %v869 = vunpack.c.l.b16 %v830
    %v870 = vunpack.c.l.b16 %v831
    %v871 = vunpack.c.l.b16 %v832
    %v872 = vunpack.c.l.b16 %v833
    %v873 = vunpack.c.l.b16 %v834
    %v874 = vunpack.c.l.b16 %v835
    %v875 = vunpack.c.l.b16 %v836
    %v876 = vunpack.c.l.b16 %v837
    %v877 = vunpack.c.l.b16 %v838
    %v878 = vunpack.c.l.b16 %v839
    %v879 = vunpack.c.l.b16 %v840
    %v880 = vunpack.c.l.b16 %v841
    %v881 = vunpack.c.l.b16 %v842
    %v882 = vunpack.c.l.b16 %v843
    %v883 = vunpack.c.l.b16 %v844
    %v884 = vpack.c.b16 %v869, %v868
    %v885 = vpack.c.b16 %v871, %v870
    %v886 = vpack.c.b16 %v873, %v872
    %v887 = vpack.c.b16 %v875, %v874
    %v888 = vpack.c.b16 %v877, %v876
    %v889 = vpack.c.b16 %v879, %v878
    %v890 = vpack.c.b16 %v881, %v880
    %v891 = vpack.c.b16 %v883, %v882
    %900 = vmatprep.subr.bf16.mxu0 0
    %901 = vmatpush1.bf16.msra.mxu0 %v891
    %902 = vmatprep.subr.bf16.mxu0 0
    %903 = vmatpush1.bf16.msra.mxu0 %v890
    %904 = vmatprep.subr.bf16.mxu0 0
    %905 = vmatpush1.bf16.msra.mxu0 %v889
    %906 = vmatprep.subr.bf16.mxu0 0
    %907 = vmatpush1.bf16.msra.mxu0 %v888
    %908 = vmatprep.subr.bf16.mxu0 0
    %909 = vmatpush1.bf16.msra.mxu0 %v887
    %910 = vmatprep.subr.bf16.mxu0 0
    %911 = vmatpush1.bf16.msra.mxu0 %v886
    %912 = vmatprep.subr.bf16.mxu0 0
    %913 = vmatpush1.bf16.msra.mxu0 %v885
    %914 = vmatprep.subr.bf16.mxu0 0
    %915 = vmatpush1.bf16.msra.mxu0 %v884
    %916 = vmatprep.subr.bf16.mxu0 0
    %917 = vmatpush2.bf16.msra.mxu0 0
    %918 = vmatprep.subr.bf16.mxu0 0
    %919 = vmatpush2.bf16.msra.mxu0 0
    %920 = vmatprep.subr.bf16.mxu0 0
    %921 = vmatpush2.bf16.msra.mxu0 0
    %922 = vmatprep.subr.bf16.mxu0 0
    %923 = vmatpush2.bf16.msra.mxu0 0
    %924 = vmatprep.subr.bf16.mxu0 0
    %925 = vmatpush2.bf16.msra.mxu0 0
    %926 = vmatprep.subr.bf16.mxu0 0
    %927 = vmatpush2.bf16.msra.mxu0 0
    %928 = vmatprep.subr.bf16.mxu0 0
    %929 = vmatpush2.bf16.msra.mxu0 0
    %930 = vmatprep.subr.bf16.mxu0 0
    %931 = vmatpush2.bf16.msra.mxu0 0
    %932 = vmatprep.mubr.bf16.mxu0 0
    %933 = vmatmul.mubr.bf16.gmra.mxu0 %v828
    %v934 = vpop.f32.mrf.mxu0
    %v935 = vadd.f32 %v850, %v934
    %v936 = vpop.f32.mrf.mxu0
    %v937 = vpop.f32.mrf.mxu0
    %v938 = vpop.f32.mrf.mxu0
    %939 = vdwg.mxu0
    %940 = vst [vmem:[#allocation10] sm:$0x3] %v935
    // Predicated region
    $region46: #{tpu_custom_call.1} parent=1 // pred_check
      _
    $region47: #{tpu_custom_call.1} parent=1 // pred_check_branch
      %942 = sbr.rel (0) target = $region49
    $region48: #{tpu_custom_call.1} parent=1 // pred_region
      %s944 = ssub.s32 32, 32
      %945 = vsyncadd [#allocation4], %s944
      %s947 = sshll.u32 [#allocation10], 4
      %s948 = int_to_ptr.vmem [resolvable:$true] %s947
      %950 = dma.vmem_to_hbm [thread:$0]  %s948, 32, %s7, [#allocation4]
    $region49: #{tpu_custom_call.1} parent=1 // pred_fallthru
      _
    // Predicated region
    $region50: #{tpu_custom_call.1} parent=1 // pred_check
      _
    $region51: #{tpu_custom_call.1} parent=1 // pred_check_branch
      %952 = sbr.rel (0) target = $region53
    $region52: #{tpu_custom_call.1} parent=1 // pred_region
      %953 = dma.done [#allocation4], 32
    $region53: #{tpu_custom_call.1} parent=1 // pred_fallthru
      _
    %954 = vsyncpa [#allocation3], 1
    %955 = vsyncpa [#allocation6], 1
    %956 = vsyncpa [#allocation9], 1
    %957 = vsyncpa [#allocation4], 1

</llo_original>
